<compile_context>
chip_gen: v7x
topology: tpu7x:2x2x1
jax: 0.10.0
libtpu: 0.0.40
codegen_flags: <defaults>
</compile_context>

<pallas_src>
import functools

import jax
import jax.numpy as jnp
from jax.experimental import pallas as pl
from jax.experimental.pallas import tpu as pltpu


def _round_up(x, m):
    return (x + m - 1) // m * m


def _cdiv(a, b):
    return (a + b - 1) // b


def _vmem_capacity_bytes(default=64 * 1024 * 1024):
    """Per-core VMEM capacity; conservative (v7x-sized) fallback."""
    try:
        cap = getattr(pltpu.get_tpu_info(), "vmem_capacity_bytes", None)
        if cap:
            return int(cap)
    except Exception:
        pass
    return default


def _nconv_kernel(a_ref, x_ref, o_ref):
    # a_ref: (W, V)   — adjacency, same block every grid step (stays resident)
    # x_ref: (V, TM)  — lane-dense slab of the fused (n, c, l) axis
    # o_ref: (W, TM)  — lane-dense output slab (full-tile stores)
    o_ref[...] = jnp.dot(
        a_ref[...], x_ref[...], preferred_element_type=jnp.float32
    ).astype(o_ref.dtype)


@functools.partial(
    jax.jit,
    static_argnames=("out_dtype", "compute_dtype", "max_tile_m",
                     "vmem_budget_bytes", "vmem_limit_bytes"),
)
def nconv_fused(x_vm, A, *, out_dtype=None, compute_dtype=jnp.bfloat16,
                max_tile_m=8192, vmem_budget_bytes=None,
                vmem_limit_bytes=None):
    """Fused-layout nconv: out_vm = A @ x_vm.

    x_vm: (V, M) with M = N*C*L (fused lane axis), A: (W, V) -> (W, M).
    Performs no padding and no relayout; keep activations in this layout
    across consecutive HGCN layers to amortize the NCVL transposes.
    """
    V, M = x_vm.shape
    W, V2 = A.shape
    if V2 != V:
        raise ValueError(f"A second dim {V2} must match node dim {V}")

    out_dtype = jnp.dtype(x_vm.dtype if out_dtype is None else out_dtype)
    if compute_dtype is not None:
        x_vm = x_vm.astype(compute_dtype)
        A = A.astype(compute_dtype)
    else:
        A = A.astype(x_vm.dtype)
    in_isz = jnp.dtype(x_vm.dtype).itemsize
    out_isz = out_dtype.itemsize

    # ---- VMEM-aware lane-tile sizing (dtype-correct accounting) ------------
    vmem_cap = _vmem_capacity_bytes()
    if vmem_budget_bytes is None:
        # ~1/3 of physical VMEM: ~21 MiB on v7x (64 MiB), 40 MiB on v5e/v6e.
        vmem_budget_bytes = min(vmem_cap // 3, 40 * 1024 * 1024)
    # Per output lane: double-buffered x tile + double-buffered out tile
    # + one f32 accumulator column (matmul result before the output cast).
    per_lane = 2 * V * in_isz + 2 * W * out_isz + W * 4
    a_bytes = 2 * W * V * in_isz            # A block (counted double-buffered)
    cap_tile = max(128, (vmem_budget_bytes - a_bytes) // per_lane // 128 * 128)
    cap_tile = min(cap_tile, max(128, int(max_tile_m)))

    if M <= cap_tile:
        tile_m = M              # single block; block dim == full dim is legal
    else:
        # Balance tile sizes so the last (partial) block isn't tiny.
        n_tiles = _cdiv(M, cap_tile)
        tile_m = min(cap_tile, _round_up(_cdiv(M, n_tiles), 128))
    grid_m = _cdiv(M, tile_m)

    if vmem_limit_bytes is None:
        usage = a_bytes + per_lane * tile_m + 2 * 1024 * 1024
        vmem_limit_bytes = int(max(
            usage,
            min(vmem_cap * 3 // 4, max(32 * 1024 * 1024, usage * 3 // 2)),
        ))

    cost = pl.CostEstimate(
        flops=2 * W * V * M,
        transcendentals=0,
        bytes_accessed=V * M * in_isz + W * V * in_isz + W * M * out_isz,
    )

    return pl.pallas_call(
        _nconv_kernel,
        out_shape=jax.ShapeDtypeStruct((W, M), out_dtype),
        grid_spec=pltpu.PrefetchScalarGridSpec(
            num_scalar_prefetch=0,
            grid=(grid_m,),
            in_specs=[
                # A: same full block every step -> no re-DMA across the grid.
                pl.BlockSpec((W, V), lambda m: (0, 0)),
                # X: lane-dense slab of the fused (n, c, l) axis.
                pl.BlockSpec((V, tile_m), lambda m: (0, m)),
            ],
            out_specs=pl.BlockSpec((W, tile_m), lambda m: (0, m)),
        ),
        compiler_params=pltpu.CompilerParams(
            # Single independent M axis -> megacore/TC-shardable.
            dimension_semantics=("parallel",),
            vmem_limit_bytes=int(vmem_limit_bytes),
        ),
        cost_estimate=cost,
    )(A, x_vm)


@functools.partial(
    jax.jit,
    static_argnames=("out_dtype", "compute_dtype", "max_tile_m",
                     "vmem_budget_bytes", "vmem_limit_bytes"),
)
def nconv(x, A, *, out_dtype=None, compute_dtype=jnp.bfloat16,
          max_tile_m=8192, vmem_budget_bytes=None, vmem_limit_bytes=None):
    """HGCN nconv: out[n,c,w,l] = sum_v x[n,c,v,l] * A[w,v].

    x: (N, C, V, L), A: (W, V) -> (N, C, W, L) with dtype x.dtype (default).

    compute_dtype=jnp.bfloat16 (default) halves the dominant x HBM stream;
    accumulation stays f32 via preferred_element_type.  Pass
    compute_dtype=None for exact f32 compute.  For chained layers prefer
    `nconv_fused`, which works on the fused (V, N*C*L) layout directly.
    """
    N, C, V, L = x.shape
    W, V2 = A.shape
    if V2 != V:
        raise ValueError(f"A second dim {V2} must match node dim {V}")
    out_dtype = jnp.dtype(x.dtype if out_dtype is None else out_dtype)
    M = N * C * L

    # One relayout pass in: fused (under jit) with the compute-dtype cast so
    # the written intermediate is half-size for bf16 compute.
    xc = x if compute_dtype is None else x.astype(compute_dtype)
    x_vm = jnp.transpose(xc, (2, 0, 1, 3)).reshape(V, M)

    out_vm = nconv_fused(
        x_vm, A, out_dtype=out_dtype, compute_dtype=compute_dtype,
        max_tile_m=max_tile_m, vmem_budget_bytes=vmem_budget_bytes,
        vmem_limit_bytes=vmem_limit_bytes)

    # One relayout pass out, back to the PyTorch NCWL layout.
    return jnp.transpose(out_vm.reshape(W, N, C, L), (1, 2, 0, 3))


def _ref_nconv(x, A):
    # Exact PyTorch semantics: out[n,c,w,l] = sum_v x[n,c,v,l] * A[w,v]
    return jnp.einsum("ncvl,wv->ncwl", x, A)


if __name__ == "__main__":
    # ---- Test 1: default bf16-compute path, small module-like shapes -------
    k_x, k_a = jax.random.split(jax.random.PRNGKey(0))
    N, C, V, L = 2, 4, 16, 8
    W = V  # adjacency is square in HGCN
    x = jax.random.normal(k_x, (N, C, V, L), dtype=jnp.float32)
    A = jax.random.normal(k_a, (W, V), dtype=jnp.float32)

    out = jax.block_until_ready(nconv(x, A))
    ref_bf = _ref_nconv(x.astype(jnp.bfloat16).astype(jnp.float32),
                        A.astype(jnp.bfloat16).astype(jnp.float32))
    assert out.shape == (N, C, W, L) and out.dtype == jnp.float32
    assert jnp.allclose(out, ref_bf, atol=2e-2, rtol=2e-2)

    # ---- Test 2: exact f32 path, non-(8,128)-aligned node / seq sizes ------
    k_x2, k_a2 = jax.random.split(jax.random.PRNGKey(1))
    N2, C2, V2, L2 = 3, 5, 20, 12
    W2 = V2
    x_odd = jax.random.normal(k_x2, (N2, C2, V2, L2), dtype=jnp.float32)
    A_odd = jax.random.normal(k_a2, (W2, V2), dtype=jnp.float32)
    out_odd = jax.block_until_ready(nconv(x_odd, A_odd, compute_dtype=None))
    assert out_odd.shape == (N2, C2, W2, L2)
    assert jnp.allclose(out_odd, _ref_nconv(x_odd, A_odd), atol=1e-4, rtol=1e-4)

    # ---- Test 3: multi-step grid with a partial (masked) last block --------
    k_x3, k_a3 = jax.random.split(jax.random.PRNGKey(2))
    N3, C3, V3, L3 = 3, 7, 24, 10           # M = 210 -> two 128-wide tiles
    x3 = jax.random.normal(k_x3, (N3, C3, V3, L3), dtype=jnp.float32)
    A3 = jax.random.normal(k_a3, (V3, V3), dtype=jnp.float32)
    out3 = jax.block_until_ready(
        nconv(x3, A3, compute_dtype=None, max_tile_m=128))
    assert jnp.allclose(out3, _ref_nconv(x3, A3), atol=1e-4, rtol=1e-4)

    # ---- Test 4: steady-state fused layout (no relayout between layers) ----
    k_a4, k_a5 = jax.random.split(jax.random.PRNGKey(3))
    A1 = jax.random.normal(k_a4, (V, V), dtype=jnp.float32)
    A2 = jax.random.normal(k_a5, (V, V), dtype=jnp.float32)
    M = N * C * L
    x_vm = jnp.transpose(x.astype(jnp.bfloat16), (2, 0, 1, 3)).reshape(V, M)
    h1 = nconv_fused(x_vm, A1, out_dtype=jnp.bfloat16)   # stays in fused layout
    h2 = jax.block_until_ready(nconv_fused(h1, A2, out_dtype=jnp.float32))
    a1b = A1.astype(jnp.bfloat16).astype(jnp.float32)
    a2b = A2.astype(jnp.bfloat16).astype(jnp.float32)
    r1 = jnp.einsum("wv,vm->wm", a1b, x_vm.astype(jnp.float32))
    r2 = jnp.einsum("wv,vm->wm", a2b,
                    r1.astype(jnp.bfloat16).astype(jnp.float32))
    assert h2.shape == (V, M)
    assert jnp.allclose(h2, r2, atol=5e-2, rtol=5e-2)

    print("KERNEL_OK")
</pallas_src>

<mosaic_0001>
module attributes {stable_mosaic.version = 11 : i64} {
  func.func @_nconv_kernel(%arg0: i32, %arg1: memref<16x16xbf16, #tpu.memory_space<vmem>>, %arg2: memref<16x64xbf16, #tpu.memory_space<vmem>>, %arg3: memref<16x64xf32, #tpu.memory_space<vmem>>) attributes {dimension_semantics = [#tpu.dimension_semantics<parallel>], iteration_bounds = array<i64: 1>, scalar_prefetch = 0 : i64, scratch_operands = 0 : i64, tpu.core_type = #tpu.core_type<tc>, window_params = [{pipeline_mode = #tpu.pipeline_mode<synchronous>, transform_indices = @transform_0, window_bounds = array<i64: 16, 16>}, {transform_indices = @transform_1, window_bounds = array<i64: 16, 64>}, {transform_indices = @transform_2, window_bounds = array<i64: 16, 64>}]} {
    %c0 = arith.constant 0 : index
    %c0_0 = arith.constant 0 : index
    %0 = vector.load %arg1[%c0, %c0_0] : memref<16x16xbf16, #tpu.memory_space<vmem>>, vector<16x16xbf16>
    %c0_1 = arith.constant 0 : index
    %c0_2 = arith.constant 0 : index
    %1 = vector.load %arg2[%c0_1, %c0_2] : memref<16x64xbf16, #tpu.memory_space<vmem>>, vector<16x64xbf16>
    %cst = arith.constant dense<0.000000e+00> : vector<16x64xf32>
    %2 = tpu.matmul %0, %1, %cst {dimension_numbers = #tpu.dot_dimension_numbers<[1], [0], [0], [1], [0, 0, 1, 1], [], []>} : vector<16x16xbf16>, vector<16x64xbf16>, vector<16x64xf32> -> vector<16x64xf32>
    %c0_3 = arith.constant 0 : index
    %c0_4 = arith.constant 0 : index
    %3 = vector.load %arg3[%c0_3, %c0_4] : memref<16x64xf32, #tpu.memory_space<vmem>>, vector<16x64xf32>
    tpu.vector_store %arg3[%c0_3, %c0_4], %2 {strides = array<i32>} : memref<16x64xf32, #tpu.memory_space<vmem>>, vector<16x64xf32>,
    return
  }
  func.func @transform_0(%arg0: i32) -> (i32, i32) {
    %c0_i32 = arith.constant 0 : i32
    %c0_i32_0 = arith.constant 0 : i32
    %c0_i32_1 = arith.constant 0 : i32
    return %c0_i32, %c0_i32_0 : i32, i32
  }
  func.func @transform_1(%arg0: i32) -> (i32, i32) {
    %c0_i32 = arith.constant 0 : i32
    %c0_i32_0 = arith.constant 0 : i32
    return %c0_i32, %arg0 : i32, i32
  }
  func.func @transform_2(%arg0: i32) -> (i32, i32) {
    %c0_i32 = arith.constant 0 : i32
    %c0_i32_0 = arith.constant 0 : i32
    return %c0_i32, %arg0 : i32, i32
  }
}

</mosaic_0001>

<llo_original>
// kernel: nconv_fused.1
$region0: #{nconv_fused.1}
  #allocation0 [shape = 'u32[]', space=smem, size = 0x4, offset = 0x4, fixed_abs, tag = 'smem constant byte address 0x4 - core index']
  #allocation1 [shape = 'u32[144,128]{1,0:T(1,128)}', space=vmem, size = 0x12000, scoped, tag = 'internal scratch']
  %s0 = inlined_call_operand.vmem [shape: bf16[16,16], index: 0, kind: input, shape index: {}]
  %s1 = inlined_call_operand.vmem [shape: bf16[16,64], index: 1, kind: input, shape index: {}]
  %s2 = inlined_call_operand.hbm [shape: f32[16,64], index: 2, kind: output, shape index: {}]
  %s3 = sld [smem:[#allocation0]]
  $region18: #{nconv_fused.1} parent=0
    _
  %s5 = ssub.s32 1, %s3
  %s6 = scalar_select 0, %s5, %s3
  $region1: #{nconv_fused.1} parent=0
    #allocation2 [shape = 'u8[8192]{0}', space=vmem, size = 0x2000, scoped, tag = 'output window, operand 0, single buffered']
    #allocation3 [shape = 's32[1]{0}', space=sflag, size = 0x4, scoped, tag = 'scoped memory for nconv_fused.1']
    %7 = vsyncpa [#allocation3], 0
    // Predicated region
    $region2: #{nconv_fused.1} parent=1 // pred_check
      _
    $region3: #{nconv_fused.1} parent=1 // pred_check_branch
      %9 = sbr.rel (0) target = $region5
    $region4: #{nconv_fused.1} parent=1 // pred_region
      _
    $region5: #{nconv_fused.1} parent=1 // pred_fallthru
      _
    // Predicated region
    $region6: #{nconv_fused.1} parent=1 // pred_check
      _
    $region7: #{nconv_fused.1} parent=1 // pred_check_branch
      %11 = sbr.rel (0) target = $region9
    $region8: #{nconv_fused.1} parent=1 // pred_region
      _
    $region9: #{nconv_fused.1} parent=1 // pred_fallthru
      _
    %v13 = vld [vmem:[%s0] sm:$0xf]
    %v14 = vld [vmem:[%s0 + $0x4] sm:$0xf]
    %v15 = vld [vmem:[%s1] sm:$0xf]
    %v16 = vld [vmem:[%s1 + $0x4] sm:$0xf]
    %v19 = vunpack.c.l.b16 %v13
    %v20 = vunpack.c.l.b16 %v14
    %v21 = vpack.c.b16 %v20, %v19
    %v24 = vunpack.c.l.b16 %v15
    %v25 = vunpack.c.l.b16 %v16
    %v26 = vpack.c.b16 %v25, %v24
    %vm28 = vcmask 130048
    %v30 = vsel %vm28, %v21, 0
    %32 = vmatprep.subr.bf16.mxu0 0
    %33 = vmatpush1.bf16.msra.mxu0 %v26
    %34 = vmatprep.subr.bf16.mxu0 0
    %35 = vmatpush1.bf16.msra.mxu0 0
    %36 = vmatprep.subr.bf16.mxu0 0
    %37 = vmatpush1.bf16.msra.mxu0 0
    %38 = vmatprep.subr.bf16.mxu0 0
    %39 = vmatpush1.bf16.msra.mxu0 0
    %40 = vmatprep.subr.bf16.mxu0 0
    %41 = vmatpush1.bf16.msra.mxu0 0
    %42 = vmatprep.subr.bf16.mxu0 0
    %43 = vmatpush1.bf16.msra.mxu0 0
    %44 = vmatprep.subr.bf16.mxu0 0
    %45 = vmatpush1.bf16.msra.mxu0 0
    %46 = vmatprep.subr.bf16.mxu0 0
    %47 = vmatpush1.bf16.msra.mxu0 0
    %48 = vmatprep.subr.bf16.mxu0 0
    %49 = vmatpush1.bf16.msra.mxu0 0
    %50 = vmatprep.subr.bf16.mxu0 0
    %51 = vmatpush1.bf16.msra.mxu0 0
    %52 = vmatprep.subr.bf16.mxu0 0
    %53 = vmatpush1.bf16.msra.mxu0 0
    %54 = vmatprep.subr.bf16.mxu0 0
    %55 = vmatpush1.bf16.msra.mxu0 0
    %56 = vmatprep.subr.bf16.mxu0 0
    %57 = vmatpush1.bf16.msra.mxu0 0
    %58 = vmatprep.subr.bf16.mxu0 0
    %59 = vmatpush1.bf16.msra.mxu0 0
    %60 = vmatprep.subr.bf16.mxu0 0
    %61 = vmatpush1.bf16.msra.mxu0 0
    %62 = vmatprep.subr.bf16.mxu0 0
    %63 = vmatpush1.bf16.msra.mxu0 0
    %64 = vmatprep.mubr.bf16.mxu0 0
    %65 = vmatmul.mubr.bf16.gmra.mrb[0].mxu0 %v30
    %v66 = vpop.f32.mrb[0].mxu0
    %v67 = vadd.f32 0.0, %v66
    %v68 = vpop.f32.mrb[0].mxu0
    %v69 = vpop.f32.mrb[0].mxu0
    %v70 = vadd.f32 0.0, %v69
    %v71 = vpop.f32.mrb[0].mxu0
    %72 = vdwg.mxu0
    %vm73 = vcmask 523264
    %74 = vst.msk [vmem:[#allocation2] sm:$0xff] %vm73, %v67
    %75 = vst.msk [vmem:[#allocation2 + $0x8] sm:$0xff] %vm73, %v70
    // Predicated region
    $region10: #{nconv_fused.1} parent=1 // pred_check
      _
    $region11: #{nconv_fused.1} parent=1 // pred_check_branch
      %77 = sbr.rel (0) target = $region13
    $region12: #{nconv_fused.1} parent=1 // pred_region
      %s79 = ssub.s32 256, 256
      %80 = vsyncadd [#allocation3], %s79
      %s81 = sshll.u32 [#allocation2], 4
      %s82 = int_to_ptr.vmem [resolvable:$true] %s81
      %87 = dma.vmem_to_hbm [thread:$0]  %s82, 256, %s2, [#allocation3], 128, 128, 8
    $region13: #{nconv_fused.1} parent=1 // pred_fallthru
      _
    // Predicated region
    $region14: #{nconv_fused.1} parent=1 // pred_check
      _
    $region15: #{nconv_fused.1} parent=1 // pred_check_branch
      %89 = sbr.rel (0) target = $region17
    $region16: #{nconv_fused.1} parent=1 // pred_region
      %90 = dma.done [#allocation3], 256
    $region17: #{nconv_fused.1} parent=1 // pred_fallthru
      _
    %91 = vsyncpa [#allocation3], 1

</llo_original>
